<compile_context>
chip_gen: v7x
topology: tpu7x:2x2x1
jax: 0.10.0
libtpu: 0.0.40
codegen_flags: <defaults>
</compile_context>

<pallas_src>
import math

import jax
import jax.numpy as jnp
from jax import lax
from jax.experimental import pallas as pl
from jax.experimental.pallas import tpu as pltpu

CBRT2 = math.pow(2.0, 1.0 / 3.0)


def _cdiv(a, b):
    return -(-a // b)


def _round_down_128(v):
    return max(128, (int(v) // 128) * 128)


# --------------------------------------------------------------------------
# Kernel A (one-shot): per-query complex math.
#   outputs: q = [q_re | q_im]  (B, 2R)  in the streaming dtype,
#            regularizers       (4, B, R) f32.
# --------------------------------------------------------------------------
def query_reg_kernel(lhs_ref, rel_ref, tim_ref, rnt_ref, rhs_ref,
                     q_ref, reg_ref):
    R = lhs_ref.shape[1] // 2
    lhs = lhs_ref[...]
    rel = rel_ref[...]
    tim = tim_ref[...]
    rnt = rnt_ref[...]
    rhs = rhs_ref[...]

    lre, lim = lhs[:, :R], lhs[:, R:]
    rre, rim = rel[:, :R], rel[:, R:]
    tre, tie = tim[:, :R], tim[:, R:]
    nre, nim = rnt[:, :R], rnt[:, R:]
    hre, him = rhs[:, :R], rhs[:, R:]

    # rrt = rel * time (complex product)
    rrt_re = rre * tre - rim * tie
    rrt_im = rim * tre + rre * tie
    # full_rel = rrt + rel_no_time
    fr_re = rrt_re + nre
    fr_im = rrt_im + nim

    # q = lhs * full_rel (complex product), packed [re | im]
    q_re = lre * fr_re - lim * fr_im
    q_im = lim * fr_re + lre * fr_im
    q_ref[...] = jnp.concatenate([q_re, q_im], axis=1).astype(q_ref.dtype)

    # Regularizers as a (4, B, R) slab — aligned full-width stores.
    reg_ref[0] = CBRT2 * jnp.sqrt(lre * lre + lim * lim)
    reg_ref[1] = jnp.sqrt(rrt_re * rrt_re + rrt_im * rrt_im)
    reg_ref[2] = jnp.sqrt(nre * nre + nim * nim)
    reg_ref[3] = CBRT2 * jnp.sqrt(hre * hre + him * him)


# --------------------------------------------------------------------------
# Kernel B: streaming scores.  One MXU contraction per entity tile,
#   (B, 2R) . (2R, tile)  -> (B, tile)   with f32 accumulation.
# The table is pre-transposed so no per-step transpose is needed.
# --------------------------------------------------------------------------
def score_kernel(q_ref, wt_ref, score_ref):
    score_ref[...] = lax.dot_general(
        q_ref[...], wt_ref[...],
        dimension_numbers=(((1,), (0,)), ((), ())),
        preferred_element_type=jnp.float32,
    )


# --------------------------------------------------------------------------
# One-time table preparation (do this at parameter-init time, NOT per call).
# --------------------------------------------------------------------------
def prepare_entity_table(ent_w, rank, *, stream_dtype=jnp.bfloat16,
                         target_block_bytes=4 * 1024 * 1024,
                         max_batch=128,
                         vmem_budget_bytes=40 * 1024 * 1024):
    """Transpose / cast / pad the entity table once and pick the stream tile.

    Returns dict(table_t=(2R, N_pad) stream_dtype array, tile=int, n_ent=int).
    """
    N = int(ent_w.shape[0])
    two_r = 2 * rank
    itemsize = jnp.dtype(stream_dtype).itemsize
    col_bytes = two_r * itemsize                       # bytes / entity column

    # Tile from the per-block byte target (DMA efficiency)...
    tile = target_block_bytes // col_bytes
    # ...bounded by the VMEM budget: 2*(stream block) + 2*(f32 out block) + q.
    denom = 2 * col_bytes + 2 * max_batch * 4
    tile = min(tile, max(128, (vmem_budget_bytes - max_batch * two_r * 4) // denom))
    tile = _round_down_128(tile)

    n128 = _cdiv(N, 128) * 128
    tile = min(tile, n128)

    # Best effort: grid length >= 2 and even so v7x's two TCs get equal work.
    grid = _cdiv(N, tile)
    if grid == 1 and n128 >= 256:
        tile = _round_down_128(n128 // 2)
        grid = _cdiv(N, tile)
    elif grid > 1 and grid % 2 == 1:
        cand = _cdiv(_cdiv(N, grid + 1), 128) * 128
        if cand >= 128 and _cdiv(N, cand) % 2 == 0:
            tile = cand
            grid = _cdiv(N, tile)

    n_pad = grid * tile
    table_t = jnp.asarray(ent_w.T, dtype=stream_dtype)          # (2R, N)
    if n_pad != N:
        table_t = jnp.pad(table_t, ((0, 0), (0, n_pad - N)))    # once, at init
    return {"table_t": table_t, "tile": int(tile), "n_ent": N}


# --------------------------------------------------------------------------
# Forward
# --------------------------------------------------------------------------
def tnt_complex_forward(x, params, prepared, rank, *, no_time_emb=False):
    """Pallas implementation of TNTComplEx.forward.

    x: (B, 4) int32 quadruples (lhs, rel, rhs, timestamp)
    params: dict with 'ent', 'rel', 'time', 'rel_nt' tables (each (n, 2R), f32)
    prepared: output of prepare_entity_table(params['ent'], rank)
    returns: (scores (B, N), (reg0..reg3), time_weight, None)
    """
    ent_w = params["ent"]
    rel_w = params["rel"]
    time_w = params["time"]
    rnt_w = params["rel_nt"]

    R = rank
    two_r = 2 * R
    B = x.shape[0]
    table_t = prepared["table_t"]          # (2R, N_pad), stream dtype
    tile = prepared["tile"]
    N = prepared["n_ent"]
    stream_dtype = table_t.dtype

    # ---- embedding gathers (glue, f32) ----
    lhs = jnp.take(ent_w, x[:, 0], axis=0)
    rel = jnp.take(rel_w, x[:, 1], axis=0)
    rhs = jnp.take(ent_w, x[:, 2], axis=0)
    tim = jnp.take(time_w, x[:, 3], axis=0)
    rnt = jnp.take(rnt_w, x[:, 1], axis=0)

    # ---- Kernel A: queries + regularizers (runs once, f32 math) ----
    full = pl.BlockSpec((B, two_r), lambda i: (0, 0))
    q, reg = pl.pallas_call(
        query_reg_kernel,
        out_shape=(
            jax.ShapeDtypeStruct((B, two_r), stream_dtype),
            jax.ShapeDtypeStruct((4, B, R), jnp.float32),
        ),
        grid_spec=pltpu.PrefetchScalarGridSpec(
            num_scalar_prefetch=0,
            grid=(1,),
            in_specs=[full] * 5,
            out_specs=(
                pl.BlockSpec((B, two_r), lambda i: (0, 0)),
                pl.BlockSpec((4, B, R), lambda i: (0, 0, 0)),
            ),
        ),
        compiler_params=pltpu.CompilerParams(
            dimension_semantics=("arbitrary",),
        ),
    )(lhs, rel, tim, rnt, rhs)

    # ---- Kernel B: stream the pre-transposed, pre-padded entity table ----
    grid_n = table_t.shape[1] // tile
    itemsize = jnp.dtype(stream_dtype).itemsize
    in_block = tile * two_r * itemsize
    out_block = B * tile * 4
    needed = 2 * in_block + 2 * out_block + B * two_r * itemsize
    # Always request >= the actual need; tile was sized at prep time so this
    # stays well under v7x's 64 MiB/TC for B <= max_batch.
    vmem_limit = int(min(max(needed + (4 << 20), 16 << 20), 128 << 20))

    scores = pl.pallas_call(
        score_kernel,
        out_shape=jax.ShapeDtypeStruct((B, N), jnp.float32),
        grid_spec=pltpu.PrefetchScalarGridSpec(
            num_scalar_prefetch=0,
            grid=(grid_n,),
            in_specs=[
                pl.BlockSpec((B, two_r), lambda j: (0, 0)),
                pl.BlockSpec((two_r, tile), lambda j: (0, j)),
            ],
            out_specs=pl.BlockSpec((B, tile), lambda j: (0, j)),
        ),
        compiler_params=pltpu.CompilerParams(
            dimension_semantics=("parallel",),   # distinct output block per step
            vmem_limit_bytes=vmem_limit,
        ),
    )(q, table_t)

    regs = (reg[0], reg[1], reg[2], reg[3])
    time_out = time_w[:-1] if no_time_emb else time_w
    # TODO(synk): temporal_bias (self.W) branch not exercised (temporal_bias=False).
    return scores, regs, time_out, None


# --------------------------------------------------------------------------
# Plain-JAX reference for verification.
# --------------------------------------------------------------------------
def _reference_forward(x, params, rank):
    R = rank
    ent_w, rel_w, time_w, rnt_w = (
        params["ent"], params["rel"], params["time"], params["rel_nt"]
    )
    lhs = jnp.take(ent_w, x[:, 0], axis=0)
    rel = jnp.take(rel_w, x[:, 1], axis=0)
    rhs = jnp.take(ent_w, x[:, 2], axis=0)
    tim = jnp.take(time_w, x[:, 3], axis=0)
    rnt = jnp.take(rnt_w, x[:, 1], axis=0)
    l = (lhs[:, :R], lhs[:, R:]); r = (rel[:, :R], rel[:, R:])
    h = (rhs[:, :R], rhs[:, R:]); t = (tim[:, :R], tim[:, R:])
    n = (rnt[:, :R], rnt[:, R:])
    right = (ent_w[:, :R], ent_w[:, R:])
    rt = (r[0] * t[0], r[1] * t[0], r[0] * t[1], r[1] * t[1])
    rrt = (rt[0] - rt[3], rt[1] + rt[2])
    fr = (rrt[0] + n[0], rrt[1] + n[1])
    scores = (l[0] * fr[0] - l[1] * fr[1]) @ right[0].T + \
             (l[1] * fr[0] + l[0] * fr[1]) @ right[1].T
    reg = (
        CBRT2 * jnp.sqrt(l[0] ** 2 + l[1] ** 2),
        jnp.sqrt(rrt[0] ** 2 + rrt[1] ** 2),
        jnp.sqrt(n[0] ** 2 + n[1] ** 2),
        CBRT2 * jnp.sqrt(h[0] ** 2 + h[1] ** 2),
    )
    return scores, reg


if __name__ == "__main__":
    # Small, TNTComplEx-consistent sizes: (entities, relations, entities, timestamps)
    sizes = (256, 16, 256, 16)
    rank = 32
    init_size = 0.01
    B = 8

    key = jax.random.PRNGKey(0)
    k_ent, k_rel, k_time, k_rnt, k_q = jax.random.split(key, 5)
    params = {
        "ent": init_size * jax.random.normal(k_ent, (sizes[0], 2 * rank), jnp.float32),
        "rel": init_size * jax.random.normal(k_rel, (sizes[1], 2 * rank), jnp.float32),
        "time": init_size * jax.random.normal(k_time, (sizes[3], 2 * rank), jnp.float32),
        "rel_nt": init_size * jax.random.normal(k_rnt, (sizes[1], 2 * rank), jnp.float32),
    }

    ks = jax.random.split(k_q, 4)
    x = jnp.stack(
        [
            jax.random.randint(ks[0], (B,), 0, sizes[0]),
            jax.random.randint(ks[1], (B,), 0, sizes[1]),
            jax.random.randint(ks[2], (B,), 0, sizes[2]),
            jax.random.randint(ks[3], (B,), 0, sizes[3]),
        ],
        axis=1,
    ).astype(jnp.int32)

    ref_scores, ref_regs = _reference_forward(x, params, rank)

    # ---- f32 streaming path: exact numerics check ----
    prep_f32 = prepare_entity_table(params["ent"], rank, stream_dtype=jnp.float32)
    scores32, regs32, time_emb, w_bias = tnt_complex_forward(x, params, prep_f32, rank)
    jax.block_until_ready(scores32)
    for r in regs32:
        jax.block_until_ready(r)

    assert scores32.shape == (B, sizes[0])
    assert all(r.shape == (B, rank) for r in regs32)
    assert jnp.allclose(scores32, ref_scores, atol=1e-5, rtol=1e-5)
    for a, b in zip(regs32, ref_regs):
        assert jnp.allclose(a, b, atol=1e-5, rtol=1e-5)

    # ---- bf16 streaming path (default; halves the dominant HBM stream) ----
    prep_bf16 = prepare_entity_table(params["ent"], rank)
    scores16, regs16, _, _ = tnt_complex_forward(x, params, prep_bf16, rank)
    jax.block_until_ready(scores16)

    assert scores16.shape == (B, sizes[0])
    assert jnp.allclose(scores16, ref_scores, atol=2e-6, rtol=5e-2)
    for a, b in zip(regs16, ref_regs):
        assert jnp.allclose(a, b, atol=1e-5, rtol=1e-5)

    print("KERNEL_OK")
</pallas_src>

<mosaic_0001>
module attributes {stable_mosaic.version = 11 : i64} {
  func.func @query_reg_kernel(%arg0: i32, %arg1: memref<8x64xf32, #tpu.memory_space<vmem>>, %arg2: memref<8x64xf32, #tpu.memory_space<vmem>>, %arg3: memref<8x64xf32, #tpu.memory_space<vmem>>, %arg4: memref<8x64xf32, #tpu.memory_space<vmem>>, %arg5: memref<8x64xf32, #tpu.memory_space<vmem>>, %arg6: memref<8x64xf32, #tpu.memory_space<vmem>>, %arg7: memref<4x8x32xf32, #tpu.memory_space<vmem>>) attributes {dimension_semantics = [#tpu.dimension_semantics<arbitrary>], iteration_bounds = array<i64: 1>, scalar_prefetch = 0 : i64, scratch_operands = 0 : i64, tpu.core_type = #tpu.core_type<tc>, window_params = [{pipeline_mode = #tpu.pipeline_mode<synchronous>, transform_indices = @transform_0, window_bounds = array<i64: 8, 64>}, {pipeline_mode = #tpu.pipeline_mode<synchronous>, transform_indices = @transform_1, window_bounds = array<i64: 8, 64>}, {pipeline_mode = #tpu.pipeline_mode<synchronous>, transform_indices = @transform_2, window_bounds = array<i64: 8, 64>}, {pipeline_mode = #tpu.pipeline_mode<synchronous>, transform_indices = @transform_3, window_bounds = array<i64: 8, 64>}, {pipeline_mode = #tpu.pipeline_mode<synchronous>, transform_indices = @transform_4, window_bounds = array<i64: 8, 64>}, {pipeline_mode = #tpu.pipeline_mode<synchronous>, transform_indices = @transform_5, window_bounds = array<i64: 8, 64>}, {pipeline_mode = #tpu.pipeline_mode<synchronous>, transform_indices = @transform_6, window_bounds = array<i64: 4, 8, 32>}]} {
    %c0 = arith.constant 0 : index
    %c0_0 = arith.constant 0 : index
    %0 = vector.load %arg1[%c0, %c0_0] : memref<8x64xf32, #tpu.memory_space<vmem>>, vector<8x64xf32>
    %c0_1 = arith.constant 0 : index
    %c0_2 = arith.constant 0 : index
    %1 = vector.load %arg2[%c0_1, %c0_2] : memref<8x64xf32, #tpu.memory_space<vmem>>, vector<8x64xf32>
    %c0_3 = arith.constant 0 : index
    %c0_4 = arith.constant 0 : index
    %2 = vector.load %arg3[%c0_3, %c0_4] : memref<8x64xf32, #tpu.memory_space<vmem>>, vector<8x64xf32>
    %c0_5 = arith.constant 0 : index
    %c0_6 = arith.constant 0 : index
    %3 = vector.load %arg4[%c0_5, %c0_6] : memref<8x64xf32, #tpu.memory_space<vmem>>, vector<8x64xf32>
    %c0_7 = arith.constant 0 : index
    %c0_8 = arith.constant 0 : index
    %4 = vector.load %arg5[%c0_7, %c0_8] : memref<8x64xf32, #tpu.memory_space<vmem>>, vector<8x64xf32>
    %5 = vector.extract_strided_slice %0 {offsets = [0, 0], sizes = [8, 32], strides = [1, 1]} : vector<8x64xf32> to vector<8x32xf32>
    %6 = vector.extract_strided_slice %0 {offsets = [0, 32], sizes = [8, 32], strides = [1, 1]} : vector<8x64xf32> to vector<8x32xf32>
    %7 = vector.extract_strided_slice %1 {offsets = [0, 0], sizes = [8, 32], strides = [1, 1]} : vector<8x64xf32> to vector<8x32xf32>
    %8 = vector.extract_strided_slice %1 {offsets = [0, 32], sizes = [8, 32], strides = [1, 1]} : vector<8x64xf32> to vector<8x32xf32>
    %9 = vector.extract_strided_slice %2 {offsets = [0, 0], sizes = [8, 32], strides = [1, 1]} : vector<8x64xf32> to vector<8x32xf32>
    %10 = vector.extract_strided_slice %2 {offsets = [0, 32], sizes = [8, 32], strides = [1, 1]} : vector<8x64xf32> to vector<8x32xf32>
    %11 = vector.extract_strided_slice %3 {offsets = [0, 0], sizes = [8, 32], strides = [1, 1]} : vector<8x64xf32> to vector<8x32xf32>
    %12 = vector.extract_strided_slice %3 {offsets = [0, 32], sizes = [8, 32], strides = [1, 1]} : vector<8x64xf32> to vector<8x32xf32>
    %13 = vector.extract_strided_slice %4 {offsets = [0, 0], sizes = [8, 32], strides = [1, 1]} : vector<8x64xf32> to vector<8x32xf32>
    %14 = vector.extract_strided_slice %4 {offsets = [0, 32], sizes = [8, 32], strides = [1, 1]} : vector<8x64xf32> to vector<8x32xf32>
    %15 = arith.mulf %7, %9 : vector<8x32xf32>
    %16 = arith.mulf %8, %10 : vector<8x32xf32>
    %17 = arith.subf %15, %16 : vector<8x32xf32>
    %18 = arith.mulf %8, %9 : vector<8x32xf32>
    %19 = arith.mulf %7, %10 : vector<8x32xf32>
    %20 = arith.addf %18, %19 : vector<8x32xf32>
    %21 = arith.addf %17, %11 : vector<8x32xf32>
    %22 = arith.addf %20, %12 : vector<8x32xf32>
    %23 = arith.mulf %5, %21 : vector<8x32xf32>
    %24 = arith.mulf %6, %22 : vector<8x32xf32>
    %25 = arith.subf %23, %24 : vector<8x32xf32>
    %26 = arith.mulf %6, %21 : vector<8x32xf32>
    %27 = arith.mulf %5, %22 : vector<8x32xf32>
    %28 = arith.addf %26, %27 : vector<8x32xf32>
    %29 = tpu.concatenate %25, %28 in 1 : vector<8x32xf32>, vector<8x32xf32> -> vector<8x64xf32>
    %c0_9 = arith.constant 0 : index
    %c0_10 = arith.constant 0 : index
    %30 = vector.load %arg6[%c0_9, %c0_10] : memref<8x64xf32, #tpu.memory_space<vmem>>, vector<8x64xf32>
    tpu.vector_store %arg6[%c0_9, %c0_10], %29 {strides = array<i32>} : memref<8x64xf32, #tpu.memory_space<vmem>>, vector<8x64xf32>,
    %31 = arith.mulf %5, %5 : vector<8x32xf32>
    %32 = arith.mulf %6, %6 : vector<8x32xf32>
    %33 = arith.addf %31, %32 : vector<8x32xf32>
    %34 = math.sqrt %33 : vector<8x32xf32>
    %cst = arith.constant 1.25992107 : f32
    %35 = vector.broadcast %cst : f32 to vector<8x32xf32>
    %36 = arith.mulf %35, %34 : vector<8x32xf32>
    %c0_11 = arith.constant 0 : index
    %c0_12 = arith.constant 0 : index
    %c0_13 = arith.constant 0 : index
    %37 = vector.load %arg7[%c0_11, %c0_12, %c0_13] : memref<4x8x32xf32, #tpu.memory_space<vmem>>, vector<1x8x32xf32>
    %38 = vector.shape_cast %37 : vector<1x8x32xf32> to vector<8x32xf32>
    %39 = vector.shape_cast %36 : vector<8x32xf32> to vector<1x8x32xf32>
    tpu.vector_store %arg7[%c0_11, %c0_12, %c0_13], %39 {strides = array<i32>} : memref<4x8x32xf32, #tpu.memory_space<vmem>>, vector<1x8x32xf32>,
    %40 = arith.mulf %17, %17 : vector<8x32xf32>
    %41 = arith.mulf %20, %20 : vector<8x32xf32>
    %42 = arith.addf %40, %41 : vector<8x32xf32>
    %43 = math.sqrt %42 : vector<8x32xf32>
    %c1 = arith.constant 1 : index
    %c0_14 = arith.constant 0 : index
    %c0_15 = arith.constant 0 : index
    %44 = vector.load %arg7[%c1, %c0_14, %c0_15] : memref<4x8x32xf32, #tpu.memory_space<vmem>>, vector<1x8x32xf32>
    %45 = vector.shape_cast %44 : vector<1x8x32xf32> to vector<8x32xf32>
    %46 = vector.shape_cast %43 : vector<8x32xf32> to vector<1x8x32xf32>
    tpu.vector_store %arg7[%c1, %c0_14, %c0_15], %46 {strides = array<i32>} : memref<4x8x32xf32, #tpu.memory_space<vmem>>, vector<1x8x32xf32>,
    %47 = arith.mulf %11, %11 : vector<8x32xf32>
    %48 = arith.mulf %12, %12 : vector<8x32xf32>
    %49 = arith.addf %47, %48 : vector<8x32xf32>
    %50 = math.sqrt %49 : vector<8x32xf32>
    %c2 = arith.constant 2 : index
    %c0_16 = arith.constant 0 : index
    %c0_17 = arith.constant 0 : index
    %51 = vector.load %arg7[%c2, %c0_16, %c0_17] : memref<4x8x32xf32, #tpu.memory_space<vmem>>, vector<1x8x32xf32>
    %52 = vector.shape_cast %51 : vector<1x8x32xf32> to vector<8x32xf32>
    %53 = vector.shape_cast %50 : vector<8x32xf32> to vector<1x8x32xf32>
    tpu.vector_store %arg7[%c2, %c0_16, %c0_17], %53 {strides = array<i32>} : memref<4x8x32xf32, #tpu.memory_space<vmem>>, vector<1x8x32xf32>,
    %54 = arith.mulf %13, %13 : vector<8x32xf32>
    %55 = arith.mulf %14, %14 : vector<8x32xf32>
    %56 = arith.addf %54, %55 : vector<8x32xf32>
    %57 = math.sqrt %56 : vector<8x32xf32>
    %cst_18 = arith.constant 1.25992107 : f32
    %58 = vector.broadcast %cst_18 : f32 to vector<8x32xf32>
    %59 = arith.mulf %58, %57 : vector<8x32xf32>
    %c3 = arith.constant 3 : index
    %c0_19 = arith.constant 0 : index
    %c0_20 = arith.constant 0 : index
    %60 = vector.load %arg7[%c3, %c0_19, %c0_20] : memref<4x8x32xf32, #tpu.memory_space<vmem>>, vector<1x8x32xf32>
    %61 = vector.shape_cast %60 : vector<1x8x32xf32> to vector<8x32xf32>
    %62 = vector.shape_cast %59 : vector<8x32xf32> to vector<1x8x32xf32>
    tpu.vector_store %arg7[%c3, %c0_19, %c0_20], %62 {strides = array<i32>} : memref<4x8x32xf32, #tpu.memory_space<vmem>>, vector<1x8x32xf32>,
    return
  }
  func.func @transform_0(%arg0: i32) -> (i32, i32) {
    %c0_i32 = arith.constant 0 : i32
    %c0_i32_0 = arith.constant 0 : i32
    %c0_i32_1 = arith.constant 0 : i32
    return %c0_i32, %c0_i32_0 : i32, i32
  }
  func.func @transform_1(%arg0: i32) -> (i32, i32) {
    %c0_i32 = arith.constant 0 : i32
    %c0_i32_0 = arith.constant 0 : i32
    %c0_i32_1 = arith.constant 0 : i32
    return %c0_i32, %c0_i32_0 : i32, i32
  }
  func.func @transform_2(%arg0: i32) -> (i32, i32) {
    %c0_i32 = arith.constant 0 : i32
    %c0_i32_0 = arith.constant 0 : i32
    %c0_i32_1 = arith.constant 0 : i32
    return %c0_i32, %c0_i32_0 : i32, i32
  }
  func.func @transform_3(%arg0: i32) -> (i32, i32) {
    %c0_i32 = arith.constant 0 : i32
    %c0_i32_0 = arith.constant 0 : i32
    %c0_i32_1 = arith.constant 0 : i32
    return %c0_i32, %c0_i32_0 : i32, i32
  }
  func.func @transform_4(%arg0: i32) -> (i32, i32) {
    %c0_i32 = arith.constant 0 : i32
    %c0_i32_0 = arith.constant 0 : i32
    %c0_i32_1 = arith.constant 0 : i32
    return %c0_i32, %c0_i32_0 : i32, i32
  }
  func.func @transform_5(%arg0: i32) -> (i32, i32) {
    %c0_i32 = arith.constant 0 : i32
    %c0_i32_0 = arith.constant 0 : i32
    %c0_i32_1 = arith.constant 0 : i32
    return %c0_i32, %c0_i32_0 : i32, i32
  }
  func.func @transform_6(%arg0: i32) -> (i32, i32, i32) {
    %c0_i32 = arith.constant 0 : i32
    %c0_i32_0 = arith.constant 0 : i32
    %c0_i32_1 = arith.constant 0 : i32
    %c0_i32_2 = arith.constant 0 : i32
    return %c0_i32, %c0_i32_0, %c0_i32_1 : i32, i32, i32
  }
}

</mosaic_0001>

<llo_original>
// kernel: tpu_custom_call.1
$region0: #{tpu_custom_call.1}
  #allocation0 [shape = 'u32[]', space=smem, size = 0x4, offset = 0x4, fixed_abs, tag = 'smem constant byte address 0x4 - core index']
  #allocation1 [shape = 'u32[144,128]{1,0:T(1,128)}', space=vmem, size = 0x12000, scoped, tag = 'internal scratch']
  %s0 = inlined_call_operand.hbm [shape: f32[8,64], index: 0, kind: input, shape index: {}]
  %s1 = inlined_call_operand.hbm [shape: f32[8,64], index: 1, kind: input, shape index: {}]
  %s2 = inlined_call_operand.hbm [shape: f32[8,64], index: 2, kind: input, shape index: {}]
  %s3 = inlined_call_operand.vmem [shape: f32[8,64], index: 3, kind: input, shape index: {}]
  %s4 = inlined_call_operand.hbm [shape: f32[8,64], index: 4, kind: input, shape index: {}]
  %s5 = inlined_call_operand.hbm [shape: f32[8,64], index: 5, kind: output, shape index: {0}]
  %s6 = inlined_call_operand.hbm [shape: f32[4,8,32], index: 6, kind: output, shape index: {1}]
  %7 = xla_tuple %s5, %s6
  %s8 = sld [smem:[#allocation0]]
  $region54: #{tpu_custom_call.1} parent=0
    _
  %s10 = ssub.s32 1, %s8
  %s11 = scalar_select 0, %s10, %s8
  $region1: #{tpu_custom_call.1} parent=0
    #allocation2 [shape = 'u8[4096]{0}', space=vmem, size = 0x1000, scoped, tag = 'input window, operand 0, single buffered']
    #allocation3 [shape = 's32[1]{0}', space=sflag, size = 0x4, scoped, tag = 'scoped memory for tpu_custom_call.1']
    #allocation4 [shape = 's32[1]{0}', space=sflag, size = 0x4, scoped, tag = 'scoped memory for tpu_custom_call.1']
    #allocation5 [shape = 'u8[4096]{0}', space=vmem, size = 0x1000, scoped, tag = 'input window, operand 1, single buffered']
    #allocation6 [shape = 's32[1]{0}', space=sflag, size = 0x4, scoped, tag = 'scoped memory for tpu_custom_call.1']
    #allocation7 [shape = 'u8[4096]{0}', space=vmem, size = 0x1000, scoped, tag = 'input window, operand 2, single buffered']
    #allocation8 [shape = 'u8[4096]{0}', space=vmem, size = 0x1000, scoped, tag = 'input window, operand 4, single buffered']
    #allocation9 [shape = 's32[1]{0}', space=sflag, size = 0x4, scoped, tag = 'scoped memory for tpu_custom_call.1']
    #allocation10 [shape = 'u8[4096]{0}', space=vmem, size = 0x1000, scoped, tag = 'output window, operand 0, single buffered']
    #allocation11 [shape = 'u8[16384]{0}', space=vmem, size = 0x4000, scoped, tag = 'output window, operand 1, single buffered']
    #allocation12 [shape = 's32[1]{0}', space=sflag, size = 0x4, scoped, tag = 'scoped memory for tpu_custom_call.1']
    %12 = vsyncpa [#allocation3], 0
    %13 = vsyncpa [#allocation6], 0
    %14 = vsyncpa [#allocation9], 0
    %15 = vsyncpa [#allocation4], 0
    %16 = vsyncpa [#allocation12], 0
    // Predicated region
    $region2: #{tpu_custom_call.1} parent=1 // pred_check
      _
    $region3: #{tpu_custom_call.1} parent=1 // pred_check_branch
      %18 = sbr.rel (0) target = $region5
    $region4: #{tpu_custom_call.1} parent=1 // pred_region
      %s20 = ssub.s32 128, 128
      %21 = vsyncadd [#allocation3], %s20
      %s23 = sshll.u32 [#allocation2], 4
      %s24 = int_to_ptr.vmem [resolvable:$true] %s23
      %26 = dma.hbm_to_vmem [thread:$0]  %s0, 128, %s24, [#allocation3]
    $region5: #{tpu_custom_call.1} parent=1 // pred_fallthru
      _
    // Predicated region
    $region6: #{tpu_custom_call.1} parent=1 // pred_check
      _
    $region7: #{tpu_custom_call.1} parent=1 // pred_check_branch
      %28 = sbr.rel (0) target = $region9
    $region8: #{tpu_custom_call.1} parent=1 // pred_region
      %s30 = ssub.s32 128, 128
      %31 = vsyncadd [#allocation6], %s30
      %s33 = sshll.u32 [#allocation5], 4
      %s34 = int_to_ptr.vmem [resolvable:$true] %s33
      %36 = dma.hbm_to_vmem [thread:$0]  %s1, 128, %s34, [#allocation6]
    $region9: #{tpu_custom_call.1} parent=1 // pred_fallthru
      _
    // Predicated region
    $region10: #{tpu_custom_call.1} parent=1 // pred_check
      _
    $region11: #{tpu_custom_call.1} parent=1 // pred_check_branch
      %38 = sbr.rel (0) target = $region13
    $region12: #{tpu_custom_call.1} parent=1 // pred_region
      %s40 = ssub.s32 128, 128
      %41 = vsyncadd [#allocation6], %s40
      %s43 = sshll.u32 [#allocation7], 4
      %s44 = int_to_ptr.vmem [resolvable:$true] %s43
      %46 = dma.hbm_to_vmem [thread:$0]  %s2, 128, %s44, [#allocation6]
    $region13: #{tpu_custom_call.1} parent=1 // pred_fallthru
      _
    // Predicated region
    $region14: #{tpu_custom_call.1} parent=1 // pred_check
      _
    $region15: #{tpu_custom_call.1} parent=1 // pred_check_branch
      %48 = sbr.rel (0) target = $region17
    $region16: #{tpu_custom_call.1} parent=1 // pred_region
      _
    $region17: #{tpu_custom_call.1} parent=1 // pred_fallthru
      _
    // Predicated region
    $region18: #{tpu_custom_call.1} parent=1 // pred_check
      _
    $region19: #{tpu_custom_call.1} parent=1 // pred_check_branch
      %50 = sbr.rel (0) target = $region21
    $region20: #{tpu_custom_call.1} parent=1 // pred_region
      %s52 = ssub.s32 128, 128
      %53 = vsyncadd [#allocation9], %s52
      %s55 = sshll.u32 [#allocation8], 4
      %s56 = int_to_ptr.vmem [resolvable:$true] %s55
      %58 = dma.hbm_to_vmem [thread:$0]  %s4, 128, %s56, [#allocation9]
    $region21: #{tpu_custom_call.1} parent=1 // pred_fallthru
      _
    // Predicated region
    $region22: #{tpu_custom_call.1} parent=1 // pred_check
      _
    $region23: #{tpu_custom_call.1} parent=1 // pred_check_branch
      %60 = sbr.rel (0) target = $region25
    $region24: #{tpu_custom_call.1} parent=1 // pred_region
      %61 = dma.done [#allocation3], 128
    $region25: #{tpu_custom_call.1} parent=1 // pred_fallthru
      _
    // Predicated region
    $region26: #{tpu_custom_call.1} parent=1 // pred_check
      _
    $region27: #{tpu_custom_call.1} parent=1 // pred_check_branch
      %63 = sbr.rel (0) target = $region29
    $region28: #{tpu_custom_call.1} parent=1 // pred_region
      %64 = dma.done [#allocation6], 128
    $region29: #{tpu_custom_call.1} parent=1 // pred_fallthru
      _
    // Predicated region
    $region30: #{tpu_custom_call.1} parent=1 // pred_check
      _
    $region31: #{tpu_custom_call.1} parent=1 // pred_check_branch
      %66 = sbr.rel (0) target = $region33
    $region32: #{tpu_custom_call.1} parent=1 // pred_region
      %67 = dma.done [#allocation6], 128
    $region33: #{tpu_custom_call.1} parent=1 // pred_fallthru
      _
    // Predicated region
    $region34: #{tpu_custom_call.1} parent=1 // pred_check
      _
    $region35: #{tpu_custom_call.1} parent=1 // pred_check_branch
      %69 = sbr.rel (0) target = $region37
    $region36: #{tpu_custom_call.1} parent=1 // pred_region
      %70 = dma.done [#allocation9], 128
    $region37: #{tpu_custom_call.1} parent=1 // pred_fallthru
      _
    %v71 = vld [vmem:[#allocation2] sm:$0xff]
    %v72 = vld [vmem:[#allocation5] sm:$0xff]
    %v73 = vld [vmem:[#allocation7] sm:$0xff]
    %v74 = vld [vmem:[%s3] sm:$0xff]
    %v75 = vld [vmem:[#allocation8] sm:$0xff]
    %v76 = vmul.f32 %v72, %v73
    %78 = vrot.lane.b32.xlu0 %v76, 96
    %v79 = vpop.permute.xlu0 %78
    %v81 = vsub.f32 %v76, %v79
    %83 = vrot.lane.b32.xlu0 %v73, 32
    %v84 = vpop.permute.xlu0 %83
    %v86 = vmul.f32 %v72, %v84
    %87 = vrot.lane.b32.xlu0 %v73, 96
    %v88 = vpop.permute.xlu0 %87
    %v90 = vmul.f32 %v72, %v88
    %92 = vrot.lane.b32.xlu0 %v90, 32
    %v93 = vpop.permute.xlu0 %92
    %v95 = vadd.f32 %v86, %v93
    %v96 = vadd.f32 %v81, %v74
    %v97 = vadd.f32 %v95, %v74
    %v98 = vmul.f32 %v71, %v96
    %v99 = vmul.f32 %v71, %v97
    %101 = vrot.lane.b32.xlu0 %v99, 96
    %v102 = vpop.permute.xlu0 %101
    %v104 = vsub.f32 %v98, %v102
    %106 = vrot.lane.b32.xlu0 %v96, 32
    %v107 = vpop.permute.xlu0 %106
    %v109 = vmul.f32 %v71, %v107
    %111 = vrot.lane.b32.xlu0 %v97, 96
    %v112 = vpop.permute.xlu0 %111
    %v114 = vmul.f32 %v71, %v112
    %116 = vrot.lane.b32.xlu0 %v114, 32
    %v117 = vpop.permute.xlu0 %116
    %v119 = vadd.f32 %v109, %v117
    %vm120 = vcmask 261120
    %v121 = vsel %vm120, %v104, %v119
    %vm122 = vcmask 523264
    %123 = vst.msk [vmem:[#allocation10] sm:$0xff] %vm122, %v121
    %v124 = vmul.f32 %v71, %v71
    %126 = vrot.lane.b32.xlu0 %v124, 96
    %v127 = vpop.permute.xlu0 %126
    %v129 = vadd.f32 %v124, %v127
    %v130 = vrsqrt.pop %v129
    %v131 = vmul.f32 %v129, %v130
    %vm132 = vcmp.eq.f32.partialorder %v129, inf
    %v133 = vsel %vm132, %v129, %v131
    %vm134 = vcmp.eq.f32.partialorder %v129, 0.0
    %v135 = vand.u32 %v129, 2147483648
    %v136 = vsel %vm134, %v135, %v133
    %v137 = vmul.f32 %v136, 1.2599211
    %138 = vst.msk [vmem:[#allocation11] sm:$0xff] %vm120, %v137
    %v139 = vmul.f32 %v81, %v81
    %v140 = vmul.f32 %v95, %v95
    %142 = vrot.lane.b32.xlu0 %v140, 96
    %v143 = vpop.permute.xlu0 %142
    %v145 = vadd.f32 %v139, %v143
    %v146 = vrsqrt.pop %v145
    %v147 = vmul.f32 %v145, %v146
    %vm148 = vcmp.eq.f32.partialorder %v145, inf
    %v149 = vsel %vm148, %v145, %v147
    %vm150 = vcmp.eq.f32.partialorder %v145, 0.0
    %v151 = vand.u32 %v145, 2147483648
    %v152 = vsel %vm150, %v151, %v149
    %s153 = scalar_lea.vmem [#allocation11], 8
    %154 = vst.msk [vmem:[%s153] sm:$0xff] %vm120, %v152
    %v155 = vmul.f32 %v74, %v74
    %157 = vrot.lane.b32.xlu0 %v155, 96
    %v158 = vpop.permute.xlu0 %157
    %v160 = vadd.f32 %v155, %v158
    %v161 = vrsqrt.pop %v160
    %v162 = vmul.f32 %v160, %v161
    %vm163 = vcmp.eq.f32.partialorder %v160, inf
    %v164 = vsel %vm163, %v160, %v162
    %vm165 = vcmp.eq.f32.partialorder %v160, 0.0
    %v166 = vand.u32 %v160, 2147483648
    %v167 = vsel %vm165, %v166, %v164
    %s168 = scalar_lea.vmem [#allocation11], 16
    %169 = vst.msk [vmem:[%s168] sm:$0xff] %vm120, %v167
    %v170 = vmul.f32 %v75, %v75
    %172 = vrot.lane.b32.xlu0 %v170, 96
    %v173 = vpop.permute.xlu0 %172
    %v175 = vadd.f32 %v170, %v173
    %v176 = vrsqrt.pop %v175
    %v177 = vmul.f32 %v175, %v176
    %vm178 = vcmp.eq.f32.partialorder %v175, inf
    %v179 = vsel %vm178, %v175, %v177
    %vm180 = vcmp.eq.f32.partialorder %v175, 0.0
    %v181 = vand.u32 %v175, 2147483648
    %v182 = vsel %vm180, %v181, %v179
    %v183 = vmul.f32 %v182, 1.2599211
    %s184 = scalar_lea.vmem [#allocation11], 24
    %185 = vst.msk [vmem:[%s184] sm:$0xff] %vm120, %v183
    // Predicated region
    $region38: #{tpu_custom_call.1} parent=1 // pred_check
      _
    $region39: #{tpu_custom_call.1} parent=1 // pred_check_branch
      %187 = sbr.rel (0) target = $region41
    $region40: #{tpu_custom_call.1} parent=1 // pred_region
      %s189 = ssub.s32 128, 128
      %190 = vsyncadd [#allocation4], %s189
      %s192 = sshll.u32 [#allocation10], 4
      %s193 = int_to_ptr.vmem [resolvable:$true] %s192
      %195 = dma.vmem_to_hbm [thread:$0]  %s193, 128, %s5, [#allocation4]
    $region41: #{tpu_custom_call.1} parent=1 // pred_fallthru
      _
    // Predicated region
    $region42: #{tpu_custom_call.1} parent=1 // pred_check
      _
    $region43: #{tpu_custom_call.1} parent=1 // pred_check_branch
      %197 = sbr.rel (0) target = $region45
    $region44: #{tpu_custom_call.1} parent=1 // pred_region
      %s199 = ssub.s32 512, 512
      %200 = vsyncadd [#allocation12], %s199
      %s201 = sshll.u32 [#allocation11], 4
      %s202 = int_to_ptr.vmem [resolvable:$true] %s201
      %207 = dma.vmem_to_hbm [thread:$0]  %s202, 512, %s6, [#allocation12], 128, 128, 8
    $region45: #{tpu_custom_call.1} parent=1 // pred_fallthru
      _
    // Predicated region
    $region46: #{tpu_custom_call.1} parent=1 // pred_check
      _
    $region47: #{tpu_custom_call.1} parent=1 // pred_check_branch
      %209 = sbr.rel (0) target = $region49
    $region48: #{tpu_custom_call.1} parent=1 // pred_region
      %210 = dma.done [#allocation4], 128
    $region49: #{tpu_custom_call.1} parent=1 // pred_fallthru
      _
    // Predicated region
    $region50: #{tpu_custom_call.1} parent=1 // pred_check
      _
    $region51: #{tpu_custom_call.1} parent=1 // pred_check_branch
      %212 = sbr.rel (0) target = $region53
    $region52: #{tpu_custom_call.1} parent=1 // pred_region
      %213 = dma.done [#allocation12], 512
    $region53: #{tpu_custom_call.1} parent=1 // pred_fallthru
      _
    %214 = vsyncpa [#allocation3], 1
    %215 = vsyncpa [#allocation6], 1
    %216 = vsyncpa [#allocation9], 1
    %217 = vsyncpa [#allocation4], 1
    %218 = vsyncpa [#allocation12], 1

</llo_original>
